<compile_context>
chip_gen: v6e
topology: v6e:2x2x1
jax: 0.10.0
libtpu: 0.0.40
codegen_flags: <defaults>
</compile_context>

<pallas_src>
import functools

import jax
import jax.numpy as jnp
from jax import lax
from jax.experimental import pallas as pl
from jax.experimental.pallas import tpu as pltpu

GAMMA = 2
ALPHA = 0.6

LANE = 128
DESIRED_ROWS = 8192            # (8192,128) f32 = 4 MiB per block per input
VMEM_LIMIT_BYTES = 48 << 20    # 2 inputs x 2 pipeline bufs x 4 MiB = 16 MiB << 48 MiB


def _round_up(x, m):
    return ((x + m - 1) // m) * m


def _tensorcores_per_chip():
    """2 TensorCores only on v7x; 1 on v5e / v6e (fallback 1 if unknown)."""
    try:
        kind = jax.devices()[0].device_kind.lower()
    except Exception:
        return 1
    return 2 if ("v7" in kind or "7x" in kind) else 1


def _ipow(x, g):
    """Integer power as repeated multiplies (stays on the VPU, off the EUP)."""
    if g == 0:
        return jnp.ones_like(x)
    r = x
    for _ in range(g - 1):
        r = r * x
    return r


def _loss_elems_f32(pt, tgt, gamma, alpha):
    """Elementwise focal loss in f32 (same formula as the kernel / reference)."""
    pt = pt.astype(jnp.float32)
    tgt = tgt.astype(jnp.float32)
    one = jnp.float32(1.0)
    one_m_pt = one - pt
    if isinstance(gamma, int) and gamma >= 0:
        pt_pow = _ipow(pt, gamma)
        one_m_pt_pow = _ipow(one_m_pt, gamma)
    else:
        pt_pow = pt ** jnp.float32(gamma)
        one_m_pt_pow = one_m_pt ** jnp.float32(gamma)
    alpha_f = jnp.float32(alpha)
    return (-alpha_f * one_m_pt_pow * tgt * jnp.log(pt)
            - (one - alpha_f) * pt_pow * (one - tgt) * jnp.log(one_m_pt))


def _focal_loss_kernel(pt_ref, tgt_ref, out_ref, *, gamma, alpha, rows,
                       block_rows, nb, mask_threshold, needs_any_mask):
    c = pl.program_id(0)          # core split ("parallel"; size 1 on 1-TC chips)
    j = pl.program_id(1)          # reduction steps per core ("arbitrary")

    @pl.when(j == 0)
    def _():
        out_ref[...] = jnp.zeros_like(out_ref)

    # Upcast in-kernel (inputs may be bf16 / f32 etc.).
    pt = pt_ref[...].astype(jnp.float32)
    tgt = tgt_ref[...].astype(jnp.float32)

    one = jnp.float32(1.0)
    alpha_f = jnp.float32(alpha)
    one_m_pt = one - pt

    if isinstance(gamma, int) and gamma >= 0:
        pt_pow = _ipow(pt, gamma)
        one_m_pt_pow = _ipow(one_m_pt, gamma)
    else:
        pt_pow = pt ** jnp.float32(gamma)
        one_m_pt_pow = one_m_pt ** jnp.float32(gamma)

    # loss = -a*(1-pt)^g * t * log(pt) - (1-a)*pt^g * (1-t) * log(1-pt)
    loss = (-alpha_f * one_m_pt_pow * tgt * jnp.log(pt)
            - (one - alpha_f) * pt_pow * (one - tgt) * jnp.log(one_m_pt))

    def partial_reduce(x):
        # Sublane-major partial reduce into the resident (8,128) accumulator;
        # the cross-lane reduce is deferred to the wrapper.
        return jnp.sum(x.reshape(block_rows // 8, 8, LANE), axis=0)

    if needs_any_mask:
        # Only the last logical block (partial rows) and clamped duplicate
        # blocks can contain invalid rows; interior blocks skip the mask.
        g = c * nb + j                      # logical (pre-clamp) block index
        needs_mask = g >= mask_threshold

        @pl.when(jnp.logical_not(needs_mask))
        def _():
            out_ref[...] += partial_reduce(loss)

        @pl.when(needs_mask)
        def _():
            row_idx = (g * block_rows
                       + lax.broadcasted_iota(jnp.int32, loss.shape, 0))
            valid = row_idx < rows
            out_ref[...] += partial_reduce(jnp.where(valid, loss,
                                                     jnp.float32(0.0)))
    else:
        out_ref[...] += partial_reduce(loss)


def bce_focal_loss(_input, target, gamma=GAMMA, alpha=ALPHA,
                   reduction='elementwise_mean'):
    """Pallas TPU implementation of BCEFocalLoss.forward."""
    pt = jnp.asarray(_input).reshape(-1)
    tgt = jnp.asarray(target)
    if not jnp.issubdtype(tgt.dtype, jnp.floating):
        tgt = tgt.astype(jnp.float32)
    tgt = tgt.reshape(-1)

    n = pt.shape[0]
    n_aligned = (n // LANE) * LANE
    rows = n_aligned // LANE

    # Ragged tail (< 128 elems): plain JAX in the wrapper -- no concatenate,
    # no full-array padded copy in HBM.
    if n_aligned < n:
        tail_sum = jnp.sum(_loss_elems_f32(pt[n_aligned:], tgt[n_aligned:],
                                           gamma, alpha))
    else:
        tail_sum = jnp.float32(0.0)

    if rows == 0:
        total = tail_sum
    else:
        if n_aligned == n:
            pt_a, tgt_a = pt, tgt             # no slice / copy on aligned sizes
        else:
            pt_a, tgt_a = pt[:n_aligned], tgt[:n_aligned]
        pt2 = pt_a.reshape(rows, LANE)
        tgt2 = tgt_a.reshape(rows, LANE)

        block_rows = min(DESIRED_ROWS, _round_up(rows, 8))
        total_blocks = pl.cdiv(rows, block_rows)
        ncores = min(_tensorcores_per_chip(), total_blocks)
        nb = pl.cdiv(total_blocks, ncores)    # reduction steps per core

        mask_threshold = rows // block_rows   # blocks below this are fully valid
        needs_any_mask = (rows % block_rows != 0) or (ncores * nb > total_blocks)

        def in_map(c, j):
            # Clamp so block indices stay in range; duplicated blocks are
            # fully masked out in-kernel (only possible when ncores > 1).
            return (jnp.minimum(c * nb + j, total_blocks - 1), 0)

        blk = pl.BlockSpec((block_rows, LANE), in_map)

        kernel = functools.partial(
            _focal_loss_kernel, gamma=gamma, alpha=alpha, rows=rows,
            block_rows=block_rows, nb=nb, mask_threshold=mask_threshold,
            needs_any_mask=needs_any_mask)

        bytes_in = n_aligned * (pt2.dtype.itemsize + tgt2.dtype.itemsize)
        cost = pl.CostEstimate(flops=12 * n_aligned,
                               transcendentals=2 * n_aligned,
                               bytes_accessed=bytes_in + ncores * 8 * LANE * 4)

        partials = pl.pallas_call(
            kernel,
            out_shape=jax.ShapeDtypeStruct((ncores * 8, LANE), jnp.float32),
            grid_spec=pltpu.PrefetchScalarGridSpec(
                num_scalar_prefetch=0,
                grid=(ncores, nb),
                in_specs=[blk, blk],
                out_specs=pl.BlockSpec((8, LANE), lambda c, j: (c, 0)),
            ),
            compiler_params=pltpu.CompilerParams(
                dimension_semantics=("parallel", "arbitrary"),
                vmem_limit_bytes=VMEM_LIMIT_BYTES),
            cost_estimate=cost,
        )(pt2, tgt2)

        total = jnp.sum(partials) + tail_sum

    if reduction == 'elementwise_mean':
        return total / jnp.float32(n)
    elif reduction == 'sum':
        return total
    else:
        # TODO(synk): reduction='none' (unreduced elementwise output) is not
        # implemented; only 'elementwise_mean' and 'sum' are supported here.
        raise NotImplementedError(f"reduction={reduction!r}")


def _reference(pt, tgt, gamma=GAMMA, alpha=ALPHA):
    pt = pt.astype(jnp.float32)
    tgt = tgt.astype(jnp.float32)
    loss = (-alpha * (1 - pt) ** gamma * tgt * jnp.log(pt)
            - (1 - alpha) * pt ** gamma * (1 - tgt) * jnp.log(1 - pt))
    return jnp.mean(loss)


if __name__ == "__main__":
    key = jax.random.PRNGKey(0)
    k1, k2 = jax.random.split(key)

    # _input is expected to already be probabilities in (0, 1) (e.g. sigmoid).
    shape = (2, 4, 16, 16)
    _input = jax.random.uniform(k1, shape, jnp.float32,
                                minval=0.05, maxval=0.95)
    target = (jax.random.uniform(k2, shape) > 0.5).astype(jnp.float32)

    loss = bce_focal_loss(_input, target)
    jax.block_until_ready(loss)

    ref = _reference(_input, target)
    assert jnp.allclose(loss, ref, rtol=1e-5, atol=1e-6), (loss, ref)

    print("KERNEL_OK")
</pallas_src>

<mosaic_0001>
module attributes {stable_mosaic.version = 11 : i64} {
  func.func @_focal_loss_kernel(%arg0: i32, %arg1: i32, %arg2: memref<16x128xf32, #tpu.memory_space<vmem>>, %arg3: memref<16x128xf32, #tpu.memory_space<vmem>>, %arg4: memref<8x128xf32, #tpu.memory_space<vmem>>) attributes {dimension_semantics = [#tpu.dimension_semantics<parallel>, #tpu.dimension_semantics<arbitrary>], iteration_bounds = array<i64: 1, 1>, scalar_prefetch = 0 : i64, scratch_operands = 0 : i64, tpu.core_type = #tpu.core_type<tc>, window_params = [{transform_indices = @transform_0, window_bounds = array<i64: 16, 128>}, {transform_indices = @transform_1, window_bounds = array<i64: 16, 128>}, {transform_indices = @transform_2, window_bounds = array<i64: 8, 128>}]} {
    %c0_i32 = arith.constant 0 : i32
    %0 = arith.cmpi eq, %arg1, %c0_i32 : i32
    %1 = arith.extui %0 : i1 to i32
    %c0_i32_0 = arith.constant 0 : i32
    %2 = arith.cmpi ne, %1, %c0_i32_0 : i32
    scf.if %2 {
      %cst_14 = arith.constant 0.000000e+00 : f32
      %29 = vector.broadcast %cst_14 : f32 to vector<8x128xf32>
      %c0_15 = arith.constant 0 : index
      %c0_16 = arith.constant 0 : index
      %30 = vector.load %arg4[%c0_15, %c0_16] : memref<8x128xf32, #tpu.memory_space<vmem>>, vector<8x128xf32>
      tpu.vector_store %arg4[%c0_15, %c0_16], %29 {strides = array<i32>} : memref<8x128xf32, #tpu.memory_space<vmem>>, vector<8x128xf32>,
    } else {
    }
    %c0 = arith.constant 0 : index
    %c0_1 = arith.constant 0 : index
    %3 = vector.load %arg2[%c0, %c0_1] : memref<16x128xf32, #tpu.memory_space<vmem>>, vector<16x128xf32>
    %c0_2 = arith.constant 0 : index
    %c0_3 = arith.constant 0 : index
    %4 = vector.load %arg3[%c0_2, %c0_3] : memref<16x128xf32, #tpu.memory_space<vmem>>, vector<16x128xf32>
    %cst = arith.constant 1.000000e+00 : f32
    %5 = vector.broadcast %cst : f32 to vector<16x128xf32>
    %6 = arith.subf %5, %3 : vector<16x128xf32>
    %7 = arith.mulf %3, %3 : vector<16x128xf32>
    %8 = arith.mulf %6, %6 : vector<16x128xf32>
    %cst_4 = arith.constant 0.000000e+00 : f32
    %cst_5 = arith.constant 6.000000e-01 : f32
    %9 = arith.subf %cst_4, %cst_5 : f32
    %10 = vector.broadcast %9 : f32 to vector<16x128xf32>
    %11 = arith.mulf %10, %8 : vector<16x128xf32>
    %12 = arith.mulf %11, %4 : vector<16x128xf32>
    %13 = math.log %3 : vector<16x128xf32>
    %14 = arith.mulf %12, %13 : vector<16x128xf32>
    %cst_6 = arith.constant 1.000000e+00 : f32
    %cst_7 = arith.constant 6.000000e-01 : f32
    %15 = arith.subf %cst_6, %cst_7 : f32
    %16 = vector.broadcast %15 : f32 to vector<16x128xf32>
    %17 = arith.mulf %16, %7 : vector<16x128xf32>
    %cst_8 = arith.constant 1.000000e+00 : f32
    %18 = vector.broadcast %cst_8 : f32 to vector<16x128xf32>
    %19 = arith.subf %18, %4 : vector<16x128xf32>
    %20 = arith.mulf %17, %19 : vector<16x128xf32>
    %21 = math.log %6 : vector<16x128xf32>
    %22 = arith.mulf %20, %21 : vector<16x128xf32>
    %23 = arith.subf %14, %22 : vector<16x128xf32>
    %c0_9 = arith.constant 0 : index
    %c0_10 = arith.constant 0 : index
    %24 = vector.load %arg4[%c0_9, %c0_10] : memref<8x128xf32, #tpu.memory_space<vmem>>, vector<8x128xf32>
    %25 = vector.shape_cast %23 : vector<16x128xf32> to vector<2x8x128xf32>
    %cst_11 = arith.constant dense<0.000000e+00> : vector<8x128xf32>
    %26 = vector.multi_reduction <add>, %25, %cst_11 [0] : vector<2x8x128xf32> to vector<8x128xf32>
    %27 = arith.addf %24, %26 : vector<8x128xf32>
    %c0_12 = arith.constant 0 : index
    %c0_13 = arith.constant 0 : index
    %28 = vector.load %arg4[%c0_12, %c0_13] : memref<8x128xf32, #tpu.memory_space<vmem>>, vector<8x128xf32>
    tpu.vector_store %arg4[%c0_12, %c0_13], %27 {strides = array<i32>} : memref<8x128xf32, #tpu.memory_space<vmem>>, vector<8x128xf32>,
    return
  }
  func.func @transform_0(%arg0: i32, %arg1: i32) -> (i32, i32) {
    %c1_i32 = arith.constant 1 : i32
    %0 = arith.muli %arg0, %c1_i32 : i32
    %1 = arith.addi %0, %arg1 : i32
    %c0_i32 = arith.constant 0 : i32
    %2 = arith.minsi %1, %c0_i32 : i32
    %c0_i32_0 = arith.constant 0 : i32
    %c0_i32_1 = arith.constant 0 : i32
    return %2, %c0_i32_0 : i32, i32
  }
  func.func @transform_1(%arg0: i32, %arg1: i32) -> (i32, i32) {
    %c1_i32 = arith.constant 1 : i32
    %0 = arith.muli %arg0, %c1_i32 : i32
    %1 = arith.addi %0, %arg1 : i32
    %c0_i32 = arith.constant 0 : i32
    %2 = arith.minsi %1, %c0_i32 : i32
    %c0_i32_0 = arith.constant 0 : i32
    %c0_i32_1 = arith.constant 0 : i32
    return %2, %c0_i32_0 : i32, i32
  }
  func.func @transform_2(%arg0: i32, %arg1: i32) -> (i32, i32) {
    %c0_i32 = arith.constant 0 : i32
    %c0_i32_0 = arith.constant 0 : i32
    return %arg0, %c0_i32 : i32, i32
  }
}

</mosaic_0001>

<llo_original>
// kernel: tpu_custom_call.1
$region0: #{tpu_custom_call.1}
  #allocation0 [shape = 'u32[]', space=smem, size = 0x4, offset = 0x4, fixed_abs, tag = 'smem constant byte address 0x4 - core index']
  #allocation1 [shape = 'u32[144,128]{1,0:T(1,128)}', space=vmem, size = 0x12000, scoped, tag = 'internal scratch']
  %s0 = inlined_call_operand.hbm [shape: f32[16,128], index: 0, kind: input, shape index: {}]
  %s1 = inlined_call_operand.hbm [shape: f32[16,128], index: 1, kind: input, shape index: {}]
  %s2 = inlined_call_operand.hbm [shape: f32[8,128], index: 2, kind: output, shape index: {}]
  %s3 = sld [smem:[#allocation0]]
  $region30: #{tpu_custom_call.1} parent=0
    _
  %s5 = ssub.s32 1, %s3
  %s6 = scalar_select 0, %s5, %s3
  $region1: #{tpu_custom_call.1} parent=0
    #allocation2 [shape = 'u8[8192]{0}', space=vmem, size = 0x2000, scoped, tag = 'input window, operand 0, single buffered']
    #allocation3 [shape = 's32[1]{0}', space=sflag, size = 0x4, scoped, tag = 'scoped memory for tpu_custom_call.1']
    #allocation4 [shape = 's32[1]{0}', space=sflag, size = 0x4, scoped, tag = 'scoped memory for tpu_custom_call.1']
    #allocation5 [shape = 'u8[8192]{0}', space=vmem, size = 0x2000, scoped, tag = 'input window, operand 1, single buffered']
    #allocation6 [shape = 's32[1]{0}', space=sflag, size = 0x4, scoped, tag = 'scoped memory for tpu_custom_call.1']
    #allocation7 [shape = 'u8[4096]{0}', space=vmem, size = 0x1000, scoped, tag = 'output window, operand 0, single buffered']
    %7 = vsyncpa [#allocation3], 0
    %8 = vsyncpa [#allocation6], 0
    %9 = vsyncpa [#allocation4], 0
    // Predicated region
    $region2: #{tpu_custom_call.1} parent=1 // pred_check
      _
    $region3: #{tpu_custom_call.1} parent=1 // pred_check_branch
      %11 = sbr.rel (0) target = $region5
    $region4: #{tpu_custom_call.1} parent=1 // pred_region
      %s12 = sadd.s32 0, 0
      %p13 = scmp.lt.s32.totalorder %s12, 0
      %s14 = scalar_select %p13, %s12, 0
      %s15 = smul.u32 2, %s14
      %s17 = ssub.s32 256, 256
      %18 = vsyncadd [#allocation3], %s17
      %s19 = smul.addr %s15, 128
      %s20 = scalar_lea.hbm %s0, %s19
      %s21 = sshll.u32 [#allocation2], 4
      %s22 = int_to_ptr.vmem [resolvable:$true] %s21
      %27 = dma.hbm_to_vmem [thread:$0]  %s20, 256, %s22, [#allocation3], 128, 128, 8
    $region5: #{tpu_custom_call.1} parent=1 // pred_fallthru
      _
    // Predicated region
    $region6: #{tpu_custom_call.1} parent=1 // pred_check
      _
    $region7: #{tpu_custom_call.1} parent=1 // pred_check_branch
      %29 = sbr.rel (0) target = $region9
    $region8: #{tpu_custom_call.1} parent=1 // pred_region
      %s30 = sadd.s32 0, 0
      %p31 = scmp.lt.s32.totalorder %s30, 0
      %s32 = scalar_select %p31, %s30, 0
      %s33 = smul.u32 2, %s32
      %s35 = ssub.s32 256, 256
      %36 = vsyncadd [#allocation6], %s35
      %s37 = smul.addr %s33, 128
      %s38 = scalar_lea.hbm %s1, %s37
      %s39 = sshll.u32 [#allocation5], 4
      %s40 = int_to_ptr.vmem [resolvable:$true] %s39
      %45 = dma.hbm_to_vmem [thread:$0]  %s38, 256, %s40, [#allocation6], 128, 128, 8
    $region9: #{tpu_custom_call.1} parent=1 // pred_fallthru
      _
    // Predicated region
    $region10: #{tpu_custom_call.1} parent=1 // pred_check
      _
    $region11: #{tpu_custom_call.1} parent=1 // pred_check_branch
      %47 = sbr.rel (0) target = $region13
    $region12: #{tpu_custom_call.1} parent=1 // pred_region
      %48 = dma.done [#allocation3], 256
    $region13: #{tpu_custom_call.1} parent=1 // pred_fallthru
      _
    // Predicated region
    $region14: #{tpu_custom_call.1} parent=1 // pred_check
      _
    $region15: #{tpu_custom_call.1} parent=1 // pred_check_branch
      %50 = sbr.rel (0) target = $region17
    $region16: #{tpu_custom_call.1} parent=1 // pred_region
      %51 = dma.done [#allocation6], 256
    $region17: #{tpu_custom_call.1} parent=1 // pred_fallthru
      _
    %s52 = sadd.s32 0, 0
    %p53 = scmp.lt.s32.totalorder %s52, 0
    %s54 = scalar_select %p53, %s52, 0
    %s55 = smul.u32 2, %s54
    %s56 = sadd.s32 0, 0
    %p57 = scmp.lt.s32.totalorder %s56, 0
    %s58 = scalar_select %p57, %s56, 0
    %s59 = smul.u32 2, %s58
    %p60 = scmp.eq.s32.totalorder 0, 0
    // Predicated region
    $region18: #{tpu_custom_call.1} parent=1 // pred_check
      %p61 = pneg %p60
    $region19: #{tpu_custom_call.1} parent=1 // pred_check_branch
      %63 = sbr.rel (%p61) target = $region21
    $region20: #{tpu_custom_call.1} parent=1 // pred_region
      %64 = vst [vmem:[#allocation7] sm:$0xff] 0.0
    $region21: #{tpu_custom_call.1} parent=1 // pred_fallthru
      _
    %v65 = vld [vmem:[#allocation2] sm:$0xff]
    %v66 = vld [vmem:[#allocation2 + $0x8] sm:$0xff]
    %v67 = vld [vmem:[#allocation5] sm:$0xff]
    %v68 = vld [vmem:[#allocation5 + $0x8] sm:$0xff]
    %v69 = vsub.f32 1.0, %v65
    %v70 = vsub.f32 1.0, %v66
    %v71 = vmul.f32 %v65, %v65
    %v72 = vmul.f32 %v66, %v66
    %v73 = vmul.f32 %v69, %v69
    %v74 = vmul.f32 %v70, %v70
    %v75 = vmul.f32 %v73, -0.6
    %v76 = vmul.f32 %v74, -0.6
    %v77 = vmul.f32 %v75, %v67
    %v78 = vmul.f32 %v76, %v68
    %v79 = vlog2.pop %v65
    %v80 = vmul.f32 %v79, 0.6931472
    %v81 = vlog2.pop %v66
    %v82 = vmul.f32 %v81, 0.6931472
    %v83 = vmul.f32 %v77, %v80
    %v84 = vmul.f32 %v78, %v82
    %v85 = vmul.f32 %v71, 0.39999998
    %v86 = vmul.f32 %v72, 0.39999998
    %v87 = vsub.f32 1.0, %v67
    %v88 = vsub.f32 1.0, %v68
    %v89 = vmul.f32 %v85, %v87
    %v90 = vmul.f32 %v86, %v88
    %v91 = vlog2.pop %v69
    %v92 = vmul.f32 %v91, 0.6931472
    %v93 = vlog2.pop %v70
    %v94 = vmul.f32 %v93, 0.6931472
    %v95 = vmul.f32 %v89, %v92
    %v96 = vmul.f32 %v90, %v94
    %v97 = vsub.f32 %v83, %v95
    %v98 = vsub.f32 %v84, %v96
    %v99 = vld [vmem:[#allocation7] sm:$0xff]
    %v100 = vadd.f32 %v97, %v98
    %v101 = vadd.f32 %v99, %v100
    %102 = vst [vmem:[#allocation7] sm:$0xff] %v101
    // Predicated region
    $region22: #{tpu_custom_call.1} parent=1 // pred_check
      _
    $region23: #{tpu_custom_call.1} parent=1 // pred_check_branch
      %104 = sbr.rel (0) target = $region25
    $region24: #{tpu_custom_call.1} parent=1 // pred_region
      %s106 = ssub.s32 128, 128
      %107 = vsyncadd [#allocation4], %s106
      %s109 = sshll.u32 [#allocation7], 4
      %s110 = int_to_ptr.vmem [resolvable:$true] %s109
      %112 = dma.vmem_to_hbm [thread:$0]  %s110, 128, %s2, [#allocation4]
    $region25: #{tpu_custom_call.1} parent=1 // pred_fallthru
      _
    // Predicated region
    $region26: #{tpu_custom_call.1} parent=1 // pred_check
      _
    $region27: #{tpu_custom_call.1} parent=1 // pred_check_branch
      %114 = sbr.rel (0) target = $region29
    $region28: #{tpu_custom_call.1} parent=1 // pred_region
      %115 = dma.done [#allocation4], 128
    $region29: #{tpu_custom_call.1} parent=1 // pred_fallthru
      _
    %116 = vsyncpa [#allocation3], 1
    %117 = vsyncpa [#allocation6], 1
    %118 = vsyncpa [#allocation4], 1

</llo_original>
